<compile_context>
chip_gen: v7x
topology: tpu7x:2x2x1
jax: 0.10.0
libtpu: 0.0.40
codegen_flags: <defaults>
</compile_context>

<pallas_src>
import jax
import jax.numpy as jnp
from jax.experimental import pallas as pl
from jax.experimental.pallas import tpu as pltpu

BN_EPS = 1e-5
LATENT_DIM = 515
HIDDEN = 512
_LANE = 128
_SUBLANE = 8

# Kernel B tiling knobs (roofline-driven: ~2 MiB x/out tiles).
_TT_TARGET = 2048                         # lane-axis tile target (mult of 128)
_DT_TARGET = 512                          # sublane-axis tile target (mult of 8)
_TILE_BYTES = 2 * 1024 * 1024             # per x/out tile budget
_LAT_RESIDENT_MAX_BYTES = 8 * 1024 * 1024 # 2 double-buffered resident lat bufs
_VMEM_LIMIT = 32 * 1024 * 1024            # scoped limit; <= half of v7x's 64 MiB

# Kernel A tiling knob (output-N tiling of the 512 x dim_in matmul).
_PROJ_TN = 512


# ---------------------------------------------------------------------------
# Kernel A: latent projection (tiny, runs once per forward call).
# ---------------------------------------------------------------------------
def _project_kernel(latent_ref, w1_ref, b1_ref, w2_ref, b2_ref, lat_ref):
    # (B, Kpad)bf16 @ (Kpad, 512)bf16 -> f32 on the MXU; BN folded into w1/b1.
    h = jnp.dot(latent_ref[...].astype(jnp.bfloat16), w1_ref[...],
                preferred_element_type=jnp.float32) + b1_ref[...]
    h = jnp.maximum(h, 0.0)
    # (B, 512)bf16 @ (512, tn)bf16 -> f32.
    lat_ref[...] = jnp.dot(h.astype(jnp.bfloat16), w2_ref[...],
                           preferred_element_type=jnp.float32) + b2_ref[...]


# ---------------------------------------------------------------------------
# Kernel B: tiled broadcast-add (the memory-bound steady state).
# ---------------------------------------------------------------------------
def _make_resident_add_kernel(dt):
    def kernel(x_ref, lat_ref, out_ref):
        # lat is resident as (1, D_pad, 1); pick this D-tile's dt window.
        d0 = pl.multiple_of(pl.program_id(1) * dt, dt)
        # (1, dt, 1) lane-broadcasts over the tt lanes of the x block.
        out_ref[...] = x_ref[...] + lat_ref[:, pl.ds(d0, dt), :]
    return kernel


def _streamed_add_kernel(x_ref, lat_ref, out_ref):
    # Fallback for very large dim_in: lat arrives as a (1, dt, 1) block.
    out_ref[...] = x_ref[...] + lat_ref[...]


# ---------------------------------------------------------------------------
# One-time parameter prep: fold eval-mode BN into Linear1, pad K, bf16 weights.
# ---------------------------------------------------------------------------
def prepare_params(params):
    w1, b1, gamma, beta, run_mean, run_var, w2, b2 = params
    scale = gamma / jnp.sqrt(run_var + BN_EPS)               # (512,) f32 fold
    w1f = w1 * scale[None, :]                                # (515, 512)
    b1f = (b1 - run_mean) * scale + beta                     # (512,)
    k = w1f.shape[0]
    k_pad = pl.cdiv(k, _LANE) * _LANE                        # 515 -> 640
    w1f = jnp.pad(w1f, ((0, k_pad - k), (0, 0)))             # zeros keep matmul exact
    # bf16 operands (f32 MXU accumulation): ~2x MXU throughput, half the VMEM.
    return (w1f.astype(jnp.bfloat16), b1f.reshape(1, -1),
            w2.astype(jnp.bfloat16), b2.reshape(1, -1), k_pad)


def latent_injector(x, latent, prepared, *, donate_x=False):
    """x: (B, D, T) f32, latent: (B, 515) f32 -> (B, D, T) f32."""
    B, D, T = x.shape
    w1f, b1f, w2, b2, k_pad = prepared

    # Per-call latent pad is tiny (B x 125 zeros); weights were padded once.
    latent_p = jnp.pad(latent, ((0, 0), (0, k_pad - latent.shape[1])))

    # --- Kernel A: projection, gridded over the output (D) axis -------------
    tn = D if D <= _PROJ_TN else _PROJ_TN
    lat = pl.pallas_call(
        _project_kernel,
        out_shape=jax.ShapeDtypeStruct((B, D), jnp.float32),
        grid=(pl.cdiv(D, tn),),
        in_specs=[
            pl.BlockSpec((B, k_pad), lambda n: (0, 0)),
            pl.BlockSpec((k_pad, HIDDEN), lambda n: (0, 0)),
            pl.BlockSpec((1, HIDDEN), lambda n: (0, 0)),
            pl.BlockSpec((HIDDEN, tn), lambda n: (0, n)),
            pl.BlockSpec((1, tn), lambda n: (0, n)),
        ],
        out_specs=pl.BlockSpec((B, tn), lambda n: (0, n)),
        compiler_params=pltpu.CompilerParams(
            dimension_semantics=("parallel",)),
    )(latent_p, w1f, b1f, w2, b2)
    # TODO(synk): for tiny D*T (launch-overhead regime) this projection could
    # be fused into kernel B under pl.when; skipped since the broadcast-add
    # dominates at production sizes.

    # --- Kernel B: tiled broadcast-add over x (HBM-bound) -------------------
    # Lane (T) tile: as large as possible (lane-dense stores for the bulk).
    tt = T if T <= _TT_TARGET else _TT_TARGET
    # Sublane (D) tile: ~2 MiB x-tile budget, multiple of 8, capped at 512.
    dt_budget = max(_SUBLANE, (_TILE_BYTES // 4 // tt) // _SUBLANE * _SUBLANE)
    dt_target = min(_DT_TARGET, dt_budget)
    dt = D if D <= dt_target else dt_target
    nd = pl.cdiv(D, dt)
    nt = pl.cdiv(T, tt)
    d_pad = nd * dt
    # TODO(synk): when production T < 128, output stores are lane-masked; a
    # (D,T) -> lane-grouped relayout (>=128 last dim) would recover dense vst.

    # Pad lat so in-kernel pl.ds windows are always in-bounds; shape (B,D_pad,1)
    # puts D on the sublane axis so the per-tile broadcast over T is a pure
    # lane-broadcast (no in-kernel transpose).
    lat3 = jnp.pad(lat, ((0, 0), (0, d_pad - D))).reshape(B, d_pad, 1)

    # Resident lat: one contiguous DMA per batch index instead of a
    # lane-width-1 strided DMA per (b, d) tile.  VMEM ~ 2 * d_pad * 128 * 4 B.
    resident = 2 * d_pad * _LANE * 4 <= _LAT_RESIDENT_MAX_BYTES
    if resident:
        lat_spec = pl.BlockSpec((1, d_pad, 1), lambda b, d, t: (b, 0, 0))
        kernel = _make_resident_add_kernel(dt)
    else:
        lat_spec = pl.BlockSpec((1, dt, 1), lambda b, d, t: (b, d, 0))
        kernel = _streamed_add_kernel

    return pl.pallas_call(
        kernel,
        out_shape=jax.ShapeDtypeStruct((B, D, T), jnp.float32),
        grid=(B, nd, nt),
        in_specs=[
            # NOTE(v5e): once tiles are final, sweep pipeline_mode=pl.Buffered(3)
            # on this x spec; keep only if measured positive.
            pl.BlockSpec((1, dt, tt), lambda b, d, t: (b, d, t)),
            lat_spec,
        ],
        out_specs=pl.BlockSpec((1, dt, tt), lambda b, d, t: (b, d, t)),
        # Callers that no longer need x can donate it to halve HBM footprint.
        input_output_aliases={0: 0} if donate_x else {},
        compiler_params=pltpu.CompilerParams(
            # Pure elementwise add: all grid axes independent -> v7x megacore
            # shards the grid across both TensorCores.
            dimension_semantics=("parallel", "parallel", "parallel"),
            # x(2)+out(2) tiles ~8 MiB + resident lat <= 8 MiB: well under the
            # 32 MiB scoped limit and half of v7x's 64 MiB physical VMEM.
            vmem_limit_bytes=_VMEM_LIMIT,
        ),
    )(x, lat3)


# ---------------------------------------------------------------------------
# Pure-JAX reference and parameter construction.
# ---------------------------------------------------------------------------
def _reference(x, latent, params):
    w1, b1, gamma, beta, run_mean, run_var, w2, b2 = params
    h = latent @ w1 + b1
    h = (h - run_mean) / jnp.sqrt(run_var + BN_EPS) * gamma + beta
    h = jnp.maximum(h, 0.0)
    lat = h @ w2 + b2
    return x + lat[:, :, None]


def make_params(key, dim_in):
    ks = jax.random.split(key, 6)
    # Linear(515, 512)
    w1 = jax.random.normal(ks[0], (LATENT_DIM, HIDDEN), jnp.float32) * 0.02
    b1 = jax.random.normal(ks[1], (HIDDEN,), jnp.float32) * 0.01
    # BatchNorm1d(512) -- eval-mode with deterministic running stats.
    # TODO(synk): training-mode BN (batch statistics) not implemented; the
    # kernel folds inference-mode running stats into Linear1.
    gamma = 1.0 + 0.1 * jax.random.normal(ks[2], (HIDDEN,), jnp.float32)
    beta = 0.1 * jax.random.normal(ks[3], (HIDDEN,), jnp.float32)
    run_mean = 0.05 * jnp.arange(HIDDEN, dtype=jnp.float32) / HIDDEN
    run_var = 1.0 + 0.5 * (jnp.arange(HIDDEN, dtype=jnp.float32) / HIDDEN)
    # Linear(512, dim_in)
    w2 = jax.random.normal(ks[4], (HIDDEN, dim_in), jnp.float32) * 0.02
    b2 = jax.random.normal(ks[5], (dim_in,), jnp.float32) * 0.01
    return (w1, b1, gamma, beta, run_mean, run_var, w2, b2)


if __name__ == "__main__":
    key = jax.random.PRNGKey(0)
    k_x, k_lat, k_p = jax.random.split(key, 3)

    B, dim_in, T = 2, 32, 16
    x = jax.random.normal(k_x, (B, dim_in, T), jnp.float32)
    latent = jax.random.normal(k_lat, (B, LATENT_DIM), jnp.float32)
    params = make_params(k_p, dim_in)
    prepared = prepare_params(params)    # BN fold + K pad + bf16 cast: once

    out = latent_injector(x, latent, prepared)
    out = jax.block_until_ready(out)

    ref = _reference(x, latent, params)
    assert out.shape == (B, dim_in, T)
    # bf16 MXU operands (f32 accumulation) vs f32 reference -> looser tolerance.
    assert jnp.allclose(out, ref, atol=3e-2, rtol=3e-2), "mismatch vs reference"
    print("KERNEL_OK")
</pallas_src>

<mosaic_0001>
module attributes {stable_mosaic.version = 11 : i64} {
  func.func @_project_kernel(%arg0: i32, %arg1: memref<2x640xf32, #tpu.memory_space<vmem>>, %arg2: memref<640x512xbf16, #tpu.memory_space<vmem>>, %arg3: memref<1x512xf32, #tpu.memory_space<vmem>>, %arg4: memref<512x32xbf16, #tpu.memory_space<vmem>>, %arg5: memref<1x32xf32, #tpu.memory_space<vmem>>, %arg6: memref<2x32xf32, #tpu.memory_space<vmem>>) attributes {dimension_semantics = [#tpu.dimension_semantics<parallel>], iteration_bounds = array<i64: 1>, scalar_prefetch = 0 : i64, scratch_operands = 0 : i64, tpu.core_type = #tpu.core_type<tc>, window_params = [{pipeline_mode = #tpu.pipeline_mode<synchronous>, transform_indices = @transform_0, window_bounds = array<i64: 2, 640>}, {pipeline_mode = #tpu.pipeline_mode<synchronous>, transform_indices = @transform_1, window_bounds = array<i64: 640, 512>}, {pipeline_mode = #tpu.pipeline_mode<synchronous>, transform_indices = @transform_2, window_bounds = array<i64: 1, 512>}, {transform_indices = @transform_3, window_bounds = array<i64: 512, 32>}, {transform_indices = @transform_4, window_bounds = array<i64: 1, 32>}, {transform_indices = @transform_5, window_bounds = array<i64: 2, 32>}]} {
    %c0 = arith.constant 0 : index
    %c0_0 = arith.constant 0 : index
    %0 = vector.load %arg1[%c0, %c0_0] : memref<2x640xf32, #tpu.memory_space<vmem>>, vector<2x640xf32>
    %1 = arith.truncf %0 : vector<2x640xf32> to vector<2x640xbf16>
    %c0_1 = arith.constant 0 : index
    %c0_2 = arith.constant 0 : index
    %2 = vector.load %arg2[%c0_1, %c0_2] : memref<640x512xbf16, #tpu.memory_space<vmem>>, vector<640x512xbf16>
    %cst = arith.constant dense<0.000000e+00> : vector<2x512xf32>
    %3 = tpu.matmul %1, %2, %cst {dimension_numbers = #tpu.dot_dimension_numbers<[1], [0], [0], [1], [0, 0, 1, 1], [], []>} : vector<2x640xbf16>, vector<640x512xbf16>, vector<2x512xf32> -> vector<2x512xf32>
    %c0_3 = arith.constant 0 : index
    %c0_4 = arith.constant 0 : index
    %4 = vector.load %arg3[%c0_3, %c0_4] : memref<1x512xf32, #tpu.memory_space<vmem>>, vector<1x512xf32>
    %5 = vector.broadcast %4 : vector<1x512xf32> to vector<2x512xf32>
    %6 = arith.addf %3, %5 : vector<2x512xf32>
    %cst_5 = arith.constant 0.000000e+00 : f32
    %7 = vector.broadcast %cst_5 : f32 to vector<2x512xf32>
    %8 = arith.maximumf %6, %7 : vector<2x512xf32>
    %9 = arith.truncf %8 : vector<2x512xf32> to vector<2x512xbf16>
    %c0_6 = arith.constant 0 : index
    %c0_7 = arith.constant 0 : index
    %10 = vector.load %arg4[%c0_6, %c0_7] : memref<512x32xbf16, #tpu.memory_space<vmem>>, vector<512x32xbf16>
    %cst_8 = arith.constant dense<0.000000e+00> : vector<2x32xf32>
    %11 = tpu.matmul %9, %10, %cst_8 {dimension_numbers = #tpu.dot_dimension_numbers<[1], [0], [0], [1], [0, 0, 1, 1], [], []>} : vector<2x512xbf16>, vector<512x32xbf16>, vector<2x32xf32> -> vector<2x32xf32>
    %c0_9 = arith.constant 0 : index
    %c0_10 = arith.constant 0 : index
    %12 = vector.load %arg5[%c0_9, %c0_10] : memref<1x32xf32, #tpu.memory_space<vmem>>, vector<1x32xf32>
    %13 = vector.broadcast %12 : vector<1x32xf32> to vector<2x32xf32>
    %14 = arith.addf %11, %13 : vector<2x32xf32>
    %c0_11 = arith.constant 0 : index
    %c0_12 = arith.constant 0 : index
    %15 = vector.load %arg6[%c0_11, %c0_12] : memref<2x32xf32, #tpu.memory_space<vmem>>, vector<2x32xf32>
    tpu.vector_store %arg6[%c0_11, %c0_12], %14 {strides = array<i32>} : memref<2x32xf32, #tpu.memory_space<vmem>>, vector<2x32xf32>,
    return
  }
  func.func @transform_0(%arg0: i32) -> (i32, i32) {
    %c0_i32 = arith.constant 0 : i32
    %c0_i32_0 = arith.constant 0 : i32
    %c0_i32_1 = arith.constant 0 : i32
    return %c0_i32, %c0_i32_0 : i32, i32
  }
  func.func @transform_1(%arg0: i32) -> (i32, i32) {
    %c0_i32 = arith.constant 0 : i32
    %c0_i32_0 = arith.constant 0 : i32
    %c0_i32_1 = arith.constant 0 : i32
    return %c0_i32, %c0_i32_0 : i32, i32
  }
  func.func @transform_2(%arg0: i32) -> (i32, i32) {
    %c0_i32 = arith.constant 0 : i32
    %c0_i32_0 = arith.constant 0 : i32
    %c0_i32_1 = arith.constant 0 : i32
    return %c0_i32, %c0_i32_0 : i32, i32
  }
  func.func @transform_3(%arg0: i32) -> (i32, i32) {
    %c0_i32 = arith.constant 0 : i32
    %c0_i32_0 = arith.constant 0 : i32
    return %c0_i32, %arg0 : i32, i32
  }
  func.func @transform_4(%arg0: i32) -> (i32, i32) {
    %c0_i32 = arith.constant 0 : i32
    %c0_i32_0 = arith.constant 0 : i32
    return %c0_i32, %arg0 : i32, i32
  }
  func.func @transform_5(%arg0: i32) -> (i32, i32) {
    %c0_i32 = arith.constant 0 : i32
    %c0_i32_0 = arith.constant 0 : i32
    return %c0_i32, %arg0 : i32, i32
  }
}

</mosaic_0001>

<llo_original>
// kernel: tpu_custom_call.1
$region0: #{tpu_custom_call.1}
  #allocation0 [shape = 'u32[]', space=smem, size = 0x4, offset = 0x4, fixed_abs, tag = 'smem constant byte address 0x4 - core index']
  #allocation1 [shape = 'u32[144,128]{1,0:T(1,128)}', space=vmem, size = 0x12000, scoped, tag = 'internal scratch']
  %s0 = inlined_call_operand.vmem [shape: f32[2,640], index: 0, kind: input, shape index: {}]
  %s1 = inlined_call_operand.hbm [shape: bf16[640,512], index: 1, kind: input, shape index: {}]
  %s2 = inlined_call_operand.vmem [shape: f32[1,512], index: 2, kind: input, shape index: {}]
  %s3 = inlined_call_operand.vmem [shape: bf16[512,32], index: 3, kind: input, shape index: {}]
  %s4 = inlined_call_operand.vmem [shape: f32[1,32], index: 4, kind: input, shape index: {}]
  %s5 = inlined_call_operand.hbm [shape: f32[2,32], index: 5, kind: output, shape index: {}]
  %s6 = sld [smem:[#allocation0]]
  $region34: #{tpu_custom_call.1} parent=0
    _
  %s8 = ssub.s32 1, %s6
  %s9 = scalar_select 0, %s8, %s6
  $region1: #{tpu_custom_call.1} parent=0
    #allocation2 [shape = 'u8[655360]{0}', space=vmem, size = 0xa0000, scoped, tag = 'input window, operand 1, single buffered']
    #allocation3 [shape = 's32[1]{0}', space=sflag, size = 0x4, scoped, tag = 'scoped memory for tpu_custom_call.1']
    #allocation4 [shape = 's32[1]{0}', space=sflag, size = 0x4, scoped, tag = 'scoped memory for tpu_custom_call.1']
    #allocation5 [shape = 'u8[1024]{0}', space=vmem, size = 0x400, scoped, tag = 'output window, operand 0, single buffered']
    %10 = vsyncpa [#allocation3], 0
    %11 = vsyncpa [#allocation4], 0
    // Predicated region
    $region2: #{tpu_custom_call.1} parent=1 // pred_check
      _
    $region3: #{tpu_custom_call.1} parent=1 // pred_check_branch
      %13 = sbr.rel (0) target = $region5
    $region4: #{tpu_custom_call.1} parent=1 // pred_region
      _
    $region5: #{tpu_custom_call.1} parent=1 // pred_fallthru
      _
    // Predicated region
    $region6: #{tpu_custom_call.1} parent=1 // pred_check
      _
    $region7: #{tpu_custom_call.1} parent=1 // pred_check_branch
      %15 = sbr.rel (0) target = $region9
    $region8: #{tpu_custom_call.1} parent=1 // pred_region
      %s17 = ssub.s32 20480, 20480
      %18 = vsyncadd [#allocation3], %s17
      %s19 = sshll.u32 [#allocation2], 4
      %s20 = int_to_ptr.vmem [resolvable:$true] %s19
      %25 = dma.hbm_to_vmem [thread:$0]  %s1, 20480, %s20, [#allocation3], 256, 256, 16
    $region9: #{tpu_custom_call.1} parent=1 // pred_fallthru
      _
    // Predicated region
    $region10: #{tpu_custom_call.1} parent=1 // pred_check
      _
    $region11: #{tpu_custom_call.1} parent=1 // pred_check_branch
      %27 = sbr.rel (0) target = $region13
    $region12: #{tpu_custom_call.1} parent=1 // pred_region
      _
    $region13: #{tpu_custom_call.1} parent=1 // pred_fallthru
      _
    // Predicated region
    $region14: #{tpu_custom_call.1} parent=1 // pred_check
      _
    $region15: #{tpu_custom_call.1} parent=1 // pred_check_branch
      %29 = sbr.rel (0) target = $region17
    $region16: #{tpu_custom_call.1} parent=1 // pred_region
      _
    $region17: #{tpu_custom_call.1} parent=1 // pred_fallthru
      _
    // Predicated region
    $region18: #{tpu_custom_call.1} parent=1 // pred_check
      _
    $region19: #{tpu_custom_call.1} parent=1 // pred_check_branch
      %31 = sbr.rel (0) target = $region21
    $region20: #{tpu_custom_call.1} parent=1 // pred_region
      _
    $region21: #{tpu_custom_call.1} parent=1 // pred_fallthru
      _
    // Predicated region
    $region22: #{tpu_custom_call.1} parent=1 // pred_check
      _
    $region23: #{tpu_custom_call.1} parent=1 // pred_check_branch
      %33 = sbr.rel (0) target = $region25
    $region24: #{tpu_custom_call.1} parent=1 // pred_region
      %34 = dma.done [#allocation3], 20480
    $region25: #{tpu_custom_call.1} parent=1 // pred_fallthru
      _
    %v36 = vld [vmem:[%s0] sm:$0xff]
    %v37 = vld [vmem:[%s0 + $0x8] sm:$0x3]
    %v40 = vcombine.high %v36, %v36
    %v42 = vunpack.c.l.s4 1983009808
    %v43 = vunpack.c.0.s8 %v42
    %v44 = vlaneseq
    %v45 = vshrl.u32 %v44, 7
    %v46 = vsub.s32 %v43, %v45
    %v47 = vrot.slane %v36, %v46
    %v49 = vunpack.c.l.s4 1983009808
    %v50 = vunpack.c.0.s8 %v49
    %v51 = vlaneseq
    %v52 = vshrl.u32 %v51, 7
    %v53 = vsub.s32 %v50, %v52
    %v54 = vrot.slane %v40, %v53
    %v55 = vcombine.high %v47, %v47
    %v56 = vcombine.high %v54, %v54
    %v58 = vunpack.c.l.s4 1983009808
    %v59 = vunpack.c.0.s8 %v58
    %v60 = vlaneseq
    %v61 = vshrl.u32 %v60, 7
    %v62 = vsub.s32 %v59, %v61
    %v63 = vrot.slane %v37, %v62
    %v69 = vpack.c.bf16 %v47, %v47
    %v70 = vpack.c.bf16 %v55, %v55
    %v71 = vpack.c.bf16 %v54, %v54
    %v72 = vpack.c.bf16 %v56, %v56
    %v73 = vpack.c.bf16 %v63, %v63
    %v74 = vld [vmem:[#allocation2] sm:$0xff]
    %v75 = vld [vmem:[#allocation2 + $0x8] sm:$0xff]
    %v76 = vld [vmem:[#allocation2 + $0x10] sm:$0xff]
    %v77 = vld [vmem:[#allocation2 + $0x18] sm:$0xff]
    %v78 = vld [vmem:[#allocation2 + $0x20] sm:$0xff]
    %v79 = vld [vmem:[#allocation2 + $0x28] sm:$0xff]
    %v80 = vld [vmem:[#allocation2 + $0x30] sm:$0xff]
    %v81 = vld [vmem:[#allocation2 + $0x38] sm:$0xff]
    %v82 = vld [vmem:[#allocation2 + $0x40] sm:$0xff]
    %v83 = vld [vmem:[#allocation2 + $0x48] sm:$0xff]
    %v84 = vld [vmem:[#allocation2 + $0x50] sm:$0xff]
    %v85 = vld [vmem:[#allocation2 + $0x58] sm:$0xff]
    %v86 = vld [vmem:[#allocation2 + $0x60] sm:$0xff]
    %v87 = vld [vmem:[#allocation2 + $0x68] sm:$0xff]
    %v88 = vld [vmem:[#allocation2 + $0x70] sm:$0xff]
    %v89 = vld [vmem:[#allocation2 + $0x78] sm:$0xff]
    %v90 = vld [vmem:[#allocation2 + $0x80] sm:$0xff]
    %v91 = vld [vmem:[#allocation2 + $0x88] sm:$0xff]
    %v92 = vld [vmem:[#allocation2 + $0x90] sm:$0xff]
    %v93 = vld [vmem:[#allocation2 + $0x98] sm:$0xff]
    %v94 = vld [vmem:[#allocation2 + $0xa0] sm:$0xff]
    %v95 = vld [vmem:[#allocation2 + $0xa8] sm:$0xff]
    %v96 = vld [vmem:[#allocation2 + $0xb0] sm:$0xff]
    %v97 = vld [vmem:[#allocation2 + $0xb8] sm:$0xff]
    %v98 = vld [vmem:[#allocation2 + $0xc0] sm:$0xff]
    %v99 = vld [vmem:[#allocation2 + $0xc8] sm:$0xff]
    %v100 = vld [vmem:[#allocation2 + $0xd0] sm:$0xff]
    %v101 = vld [vmem:[#allocation2 + $0xd8] sm:$0xff]
    %v102 = vld [vmem:[#allocation2 + $0xe0] sm:$0xff]
    %v103 = vld [vmem:[#allocation2 + $0xe8] sm:$0xff]
    %v104 = vld [vmem:[#allocation2 + $0xf0] sm:$0xff]
    %v105 = vld [vmem:[#allocation2 + $0xf8] sm:$0xff]
    %v106 = vld [vmem:[#allocation2 + $0x100] sm:$0xff]
    %v107 = vld [vmem:[#allocation2 + $0x108] sm:$0xff]
    %v108 = vld [vmem:[#allocation2 + $0x110] sm:$0xff]
    %v109 = vld [vmem:[#allocation2 + $0x118] sm:$0xff]
    %v110 = vld [vmem:[#allocation2 + $0x120] sm:$0xff]
    %v111 = vld [vmem:[#allocation2 + $0x128] sm:$0xff]
    %v112 = vld [vmem:[#allocation2 + $0x130] sm:$0xff]
    %v113 = vld [vmem:[#allocation2 + $0x138] sm:$0xff]
    %v114 = vld [vmem:[#allocation2 + $0x140] sm:$0xff]
    %v115 = vld [vmem:[#allocation2 + $0x148] sm:$0xff]
    %v116 = vld [vmem:[#allocation2 + $0x150] sm:$0xff]
    %v117 = vld [vmem:[#allocation2 + $0x158] sm:$0xff]
    %v118 = vld [vmem:[#allocation2 + $0x160] sm:$0xff]
    %v119 = vld [vmem:[#allocation2 + $0x168] sm:$0xff]
    %v120 = vld [vmem:[#allocation2 + $0x170] sm:$0xff]
    %v121 = vld [vmem:[#allocation2 + $0x178] sm:$0xff]
    %v122 = vld [vmem:[#allocation2 + $0x180] sm:$0xff]
    %v123 = vld [vmem:[#allocation2 + $0x188] sm:$0xff]
    %v124 = vld [vmem:[#allocation2 + $0x190] sm:$0xff]
    %v125 = vld [vmem:[#allocation2 + $0x198] sm:$0xff]
    %v126 = vld [vmem:[#allocation2 + $0x1a0] sm:$0xff]
    %v127 = vld [vmem:[#allocation2 + $0x1a8] sm:$0xff]
    %v128 = vld [vmem:[#allocation2 + $0x1b0] sm:$0xff]
    %v129 = vld [vmem:[#allocation2 + $0x1b8] sm:$0xff]
    %v130 = vld [vmem:[#allocation2 + $0x1c0] sm:$0xff]
    %v131 = vld [vmem:[#allocation2 + $0x1c8] sm:$0xff]
    %v132 = vld [vmem:[#allocation2 + $0x1d0] sm:$0xff]
    %v133 = vld [vmem:[#allocation2 + $0x1d8] sm:$0xff]
    %v134 = vld [vmem:[#allocation2 + $0x1e0] sm:$0xff]
    %v135 = vld [vmem:[#allocation2 + $0x1e8] sm:$0xff]
    %v136 = vld [vmem:[#allocation2 + $0x1f0] sm:$0xff]
    %v137 = vld [vmem:[#allocation2 + $0x1f8] sm:$0xff]
    %v138 = vld [vmem:[#allocation2 + $0x200] sm:$0xff]
    %v139 = vld [vmem:[#allocation2 + $0x208] sm:$0xff]
    %v140 = vld [vmem:[#allocation2 + $0x210] sm:$0xff]
    %v141 = vld [vmem:[#allocation2 + $0x218] sm:$0xff]
    %v142 = vld [vmem:[#allocation2 + $0x220] sm:$0xff]
    %v143 = vld [vmem:[#allocation2 + $0x228] sm:$0xff]
    %v144 = vld [vmem:[#allocation2 + $0x230] sm:$0xff]
    %v145 = vld [vmem:[#allocation2 + $0x238] sm:$0xff]
    %v146 = vld [vmem:[#allocation2 + $0x240] sm:$0xff]
    %v147 = vld [vmem:[#allocation2 + $0x248] sm:$0xff]
    %v148 = vld [vmem:[#allocation2 + $0x250] sm:$0xff]
    %v149 = vld [vmem:[#allocation2 + $0x258] sm:$0xff]
    %v150 = vld [vmem:[#allocation2 + $0x260] sm:$0xff]
    %v151 = vld [vmem:[#allocation2 + $0x268] sm:$0xff]
    %v152 = vld [vmem:[#allocation2 + $0x270] sm:$0xff]
    %v153 = vld [vmem:[#allocation2 + $0x278] sm:$0xff]
    %v154 = vld [vmem:[#allocation2 + $0x280] sm:$0xff]
    %v155 = vld [vmem:[#allocation2 + $0x288] sm:$0xff]
    %v156 = vld [vmem:[#allocation2 + $0x290] sm:$0xff]
    %v157 = vld [vmem:[#allocation2 + $0x298] sm:$0xff]
    %v158 = vld [vmem:[#allocation2 + $0x2a0] sm:$0xff]
    %v159 = vld [vmem:[#allocation2 + $0x2a8] sm:$0xff]
    %v160 = vld [vmem:[#allocation2 + $0x2b0] sm:$0xff]
    %v161 = vld [vmem:[#allocation2 + $0x2b8] sm:$0xff]
    %v162 = vld [vmem:[#allocation2 + $0x2c0] sm:$0xff]
    %v163 = vld [vmem:[#allocation2 + $0x2c8] sm:$0xff]
    %v164 = vld [vmem:[#allocation2 + $0x2d0] sm:$0xff]
    %v165 = vld [vmem:[#allocation2 + $0x2d8] sm:$0xff]
    %v166 = vld [vmem:[#allocation2 + $0x2e0] sm:$0xff]
    %v167 = vld [vmem:[#allocation2 + $0x2e8] sm:$0xff]
    %v168 = vld [vmem:[#allocation2 + $0x2f0] sm:$0xff]
    %v169 = vld [vmem:[#allocation2 + $0x2f8] sm:$0xff]
    %v170 = vld [vmem:[#allocation2 + $0x300] sm:$0xff]
    %v171 = vld [vmem:[#allocation2 + $0x308] sm:$0xff]
    %v172 = vld [vmem:[#allocation2 + $0x310] sm:$0xff]
    %v173 = vld [vmem:[#allocation2 + $0x318] sm:$0xff]
    %v174 = vld [vmem:[#allocation2 + $0x320] sm:$0xff]
    %v175 = vld [vmem:[#allocation2 + $0x328] sm:$0xff]
    %v176 = vld [vmem:[#allocation2 + $0x330] sm:$0xff]
    %v177 = vld [vmem:[#allocation2 + $0x338] sm:$0xff]
    %v178 = vld [vmem:[#allocation2 + $0x340] sm:$0xff]
    %v179 = vld [vmem:[#allocation2 + $0x348] sm:$0xff]
    %v180 = vld [vmem:[#allocation2 + $0x350] sm:$0xff]
    %v181 = vld [vmem:[#allocation2 + $0x358] sm:$0xff]
    %v182 = vld [vmem:[#allocation2 + $0x360] sm:$0xff]
    %v183 = vld [vmem:[#allocation2 + $0x368] sm:$0xff]
    %v184 = vld [vmem:[#allocation2 + $0x370] sm:$0xff]
    %v185 = vld [vmem:[#allocation2 + $0x378] sm:$0xff]
    %v186 = vld [vmem:[#allocation2 + $0x380] sm:$0xff]
    %v187 = vld [vmem:[#allocation2 + $0x388] sm:$0xff]
    %v188 = vld [vmem:[#allocation2 + $0x390] sm:$0xff]
    %v189 = vld [vmem:[#allocation2 + $0x398] sm:$0xff]
    %v190 = vld [vmem:[#allocation2 + $0x3a0] sm:$0xff]
    %v191 = vld [vmem:[#allocation2 + $0x3a8] sm:$0xff]
    %v192 = vld [vmem:[#allocation2 + $0x3b0] sm:$0xff]
    %v193 = vld [vmem:[#allocation2 + $0x3b8] sm:$0xff]
    %v194 = vld [vmem:[#allocation2 + $0x3c0] sm:$0xff]
    %v195 = vld [vmem:[#allocation2 + $0x3c8] sm:$0xff]
    %v196 = vld [vmem:[#allocation2 + $0x3d0] sm:$0xff]
    %v197 = vld [vmem:[#allocation2 + $0x3d8] sm:$0xff]
    %v198 = vld [vmem:[#allocation2 + $0x3e0] sm:$0xff]
    %v199 = vld [vmem:[#allocation2 + $0x3e8] sm:$0xff]
    %v200 = vld [vmem:[#allocation2 + $0x3f0] sm:$0xff]
    %v201 = vld [vmem:[#allocation2 + $0x3f8] sm:$0xff]
    %v202 = vld [vmem:[#allocation2 + $0x400] sm:$0xff]
    %v203 = vld [vmem:[#allocation2 + $0x408] sm:$0xff]
    %v204 = vld [vmem:[#allocation2 + $0x410] sm:$0xff]
    %v205 = vld [vmem:[#allocation2 + $0x418] sm:$0xff]
    %v206 = vld [vmem:[#allocation2 + $0x420] sm:$0xff]
    %v207 = vld [vmem:[#allocation2 + $0x428] sm:$0xff]
    %v208 = vld [vmem:[#allocation2 + $0x430] sm:$0xff]
    %v209 = vld [vmem:[#allocation2 + $0x438] sm:$0xff]
    %v210 = vld [vmem:[#allocation2 + $0x440] sm:$0xff]
    %v211 = vld [vmem:[#allocation2 + $0x448] sm:$0xff]
    %v212 = vld [vmem:[#allocation2 + $0x450] sm:$0xff]
    %v213 = vld [vmem:[#allocation2 + $0x458] sm:$0xff]
    %v214 = vld [vmem:[#allocation2 + $0x460] sm:$0xff]
    %v215 = vld [vmem:[#allocation2 + $0x468] sm:$0xff]
    %v216 = vld [vmem:[#allocation2 + $0x470] sm:$0xff]
    %v217 = vld [vmem:[#allocation2 + $0x478] sm:$0xff]
    %v218 = vld [vmem:[#allocation2 + $0x480] sm:$0xff]
    %v219 = vld [vmem:[#allocation2 + $0x488] sm:$0xff]
    %v220 = vld [vmem:[#allocation2 + $0x490] sm:$0xff]
    %v221 = vld [vmem:[#allocation2 + $0x498] sm:$0xff]
    %v222 = vld [vmem:[#allocation2 + $0x4a0] sm:$0xff]
    %v223 = vld [vmem:[#allocation2 + $0x4a8] sm:$0xff]
    %v224 = vld [vmem:[#allocation2 + $0x4b0] sm:$0xff]
    %v225 = vld [vmem:[#allocation2 + $0x4b8] sm:$0xff]
    %v226 = vld [vmem:[#allocation2 + $0x4c0] sm:$0xff]
    %v227 = vld [vmem:[#allocation2 + $0x4c8] sm:$0xff]
    %v228 = vld [vmem:[#allocation2 + $0x4d0] sm:$0xff]
    %v229 = vld [vmem:[#allocation2 + $0x4d8] sm:$0xff]
    %v230 = vld [vmem:[#allocation2 + $0x4e0] sm:$0xff]
    %v231 = vld [vmem:[#allocation2 + $0x4e8] sm:$0xff]
    %v232 = vld [vmem:[#allocation2 + $0x4f0] sm:$0xff]
    %v233 = vld [vmem:[#allocation2 + $0x4f8] sm:$0xff]
    %v234 = vld [vmem:[%s2] sm:$0xf]
    %v236 = vlaneseq
    %v237 = vshrl.u32 %v236, 7
    %v238 = vsub.s32 0, %v237
    %v239 = vrot.slane %v234, %v238
    %v240 = vlaneseq
    %v241 = vshrl.u32 %v240, 7
    %v242 = vsub.s32 1, %v241
    %v243 = vrot.slane %v234, %v242
    %v244 = vlaneseq
    %v245 = vshrl.u32 %v244, 7
    %v246 = vsub.s32 2, %v245
    %v247 = vrot.slane %v234, %v246
    %v248 = vlaneseq
    %v249 = vshrl.u32 %v248, 7
    %v250 = vsub.s32 3, %v249
    %v251 = vrot.slane %v234, %v250
    %v416 = vunpack.c.l.b16 %v74
    %v417 = vunpack.c.h.b16 %v74
    %v418 = vunpack.c.l.b16 %v75
    %v419 = vunpack.c.h.b16 %v75
    %v420 = vunpack.c.l.b16 %v76
    %v421 = vunpack.c.h.b16 %v76
    %v422 = vunpack.c.l.b16 %v77
    %v423 = vunpack.c.h.b16 %v77
    %v424 = vunpack.c.l.b16 %v78
    %v425 = vunpack.c.h.b16 %v78
    %v426 = vunpack.c.l.b16 %v79
    %v427 = vunpack.c.h.b16 %v79
    %v428 = vunpack.c.l.b16 %v80
    %v429 = vunpack.c.h.b16 %v80
    %v430 = vunpack.c.l.b16 %v81
    %v431 = vunpack.c.h.b16 %v81
    %v432 = vunpack.c.l.b16 %v82
    %v433 = vunpack.c.h.b16 %v82
    %v434 = vunpack.c.l.b16 %v83
    %v435 = vunpack.c.h.b16 %v83
    %v436 = vunpack.c.l.b16 %v84
    %v437 = vunpack.c.h.b16 %v84
    %v438 = vunpack.c.l.b16 %v85
    %v439 = vunpack.c.h.b16 %v85
    %v440 = vunpack.c.l.b16 %v86
    %v441 = vunpack.c.h.b16 %v86
    %v442 = vunpack.c.l.b16 %v87
    %v443 = vunpack.c.h.b16 %v87
    %v444 = vunpack.c.l.b16 %v88
    %v445 = vunpack.c.h.b16 %v88
    %v446 = vunpack.c.l.b16 %v89
    %v447 = vunpack.c.h.b16 %v89
    %v448 = vunpack.c.l.b16 %v90
    %v449 = vunpack.c.h.b16 %v90
    %v450 = vunpack.c.l.b16 %v91
    %v451 = vunpack.c.h.b16 %v91
    %v452 = vunpack.c.l.b16 %v92
    %v453 = vunpack.c.h.b16 %v92
    %v454 = vunpack.c.l.b16 %v93
    %v455 = vunpack.c.h.b16 %v93
    %v456 = vunpack.c.l.b16 %v94
    %v457 = vunpack.c.h.b16 %v94
    %v458 = vunpack.c.l.b16 %v95
    %v459 = vunpack.c.h.b16 %v95
    %v460 = vunpack.c.l.b16 %v96
    %v461 = vunpack.c.h.b16 %v96
    %v462 = vunpack.c.l.b16 %v97
    %v463 = vunpack.c.h.b16 %v97
    %v464 = vunpack.c.l.b16 %v98
    %v465 = vunpack.c.h.b16 %v98
    %v466 = vunpack.c.l.b16 %v99
    %v467 = vunpack.c.h.b16 %v99
    %v468 = vunpack.c.l.b16 %v100
    %v469 = vunpack.c.h.b16 %v100
    %v470 = vunpack.c.l.b16 %v101
    %v471 = vunpack.c.h.b16 %v101
    %v472 = vunpack.c.l.b16 %v102
    %v473 = vunpack.c.h.b16 %v102
    %v474 = vunpack.c.l.b16 %v103
    %v475 = vunpack.c.h.b16 %v103
    %v476 = vunpack.c.l.b16 %v104
    %v477 = vunpack.c.h.b16 %v104
    %v478 = vunpack.c.l.b16 %v105
    %v479 = vunpack.c.h.b16 %v105
    %v480 = vunpack.c.l.b16 %v106
    %v481 = vunpack.c.h.b16 %v106
    %v482 = vunpack.c.l.b16 %v107
    %v483 = vunpack.c.h.b16 %v107
    %v484 = vunpack.c.l.b16 %v108
    %v485 = vunpack.c.h.b16 %v108
    %v486 = vunpack.c.l.b16 %v109
    %v487 = vunpack.c.h.b16 %v109
    %v488 = vunpack.c.l.b16 %v110
    %v489 = vunpack.c.h.b16 %v110
    %v490 = vunpack.c.l.b16 %v111
    %v491 = vunpack.c.h.b16 %v111
    %v492 = vunpack.c.l.b16 %v112
    %v493 = vunpack.c.h.b16 %v112
    %v494 = vunpack.c.l.b16 %v113
    %v495 = vunpack.c.h.b16 %v113
    %v496 = vunpack.c.l.b16 %v114
    %v497 = vunpack.c.h.b16 %v114
    %v498 = vunpack.c.l.b16 %v115
    %v499 = vunpack.c.h.b16 %v115
    %v500 = vunpack.c.l.b16 %v116
    %v501 = vunpack.c.h.b16 %v116
    %v502 = vunpack.c.l.b16 %v117
    %v503 = vunpack.c.h.b16 %v117
    %v504 = vunpack.c.l.b16 %v118
    %v505 = vunpack.c.h.b16 %v118
    %v506 = vunpack.c.l.b16 %v119
    %v507 = vunpack.c.h.b16 %v119
    %v508 = vunpack.c.l.b16 %v120
    %v509 = vunpack.c.h.b16 %v120
    %v510 = vunpack.c.l.b16 %v121
    %v511 = vunpack.c.h.b16 %v121
    %v512 = vunpack.c.l.b16 %v122
    %v513 = vunpack.c.h.b16 %v122
    %v514 = vunpack.c.l.b16 %v123
    %v515 = vunpack.c.h.b16 %v123
    %v516 = vunpack.c.l.b16 %v124
    %v517 = vunpack.c.h.b16 %v124
    %v518 = vunpack.c.l.b16 %v125
    %v519 = vunpack.c.h.b16 %v125
    %v520 = vunpack.c.l.b16 %v126
    %v521 = vunpack.c.h.b16 %v126
    %v522 = vunpack.c.l.b16 %v127
    %v523 = vunpack.c.h.b16 %v127
    %v524 = vunpack.c.l.b16 %v128
    %v525 = vunpack.c.h.b16 %v128
    %v526 = vunpack.c.l.b16 %v129
    %v527 = vunpack.c.h.b16 %v129
    %v528 = vunpack.c.l.b16 %v130
    %v529 = vunpack.c.h.b16 %v130
    %v530 = vunpack.c.l.b16 %v131
    %v531 = vunpack.c.h.b16 %v131
    %v532 = vunpack.c.l.b16 %v132
    %v533 = vunpack.c.h.b16 %v132
    %v534 = vunpack.c.l.b16 %v133
    %v535 = vunpack.c.h.b16 %v133
    %v536 = vunpack.c.l.b16 %v134
    %v537 = vunpack.c.h.b16 %v134
    %v538 = vunpack.c.l.b16 %v135
    %v539 = vunpack.c.h.b16 %v135
    %v540 = vunpack.c.l.b16 %v136
    %v541 = vunpack.c.h.b16 %v136
    %v542 = vunpack.c.l.b16 %v137
    %v543 = vunpack.c.h.b16 %v137
    %v544 = vunpack.c.l.b16 %v138
    %v545 = vunpack.c.h.b16 %v138
    %v546 = vunpack.c.l.b16 %v139
    %v547 = vunpack.c.h.b16 %v139
    %v548 = vunpack.c.l.b16 %v140
    %v549 = vunpack.c.h.b16 %v140
    %v550 = vunpack.c.l.b16 %v141
    %v551 = vunpack.c.h.b16 %v141
    %v552 = vunpack.c.l.b16 %v142
    %v553 = vunpack.c.h.b16 %v142
    %v554 = vunpack.c.l.b16 %v143
    %v555 = vunpack.c.h.b16 %v143
    %v556 = vunpack.c.l.b16 %v144
    %v557 = vunpack.c.h.b16 %v144
    %v558 = vunpack.c.l.b16 %v145
    %v559 = vunpack.c.h.b16 %v145
    %v560 = vunpack.c.l.b16 %v146
    %v561 = vunpack.c.h.b16 %v146
    %v562 = vunpack.c.l.b16 %v147
    %v563 = vunpack.c.h.b16 %v147
    %v564 = vunpack.c.l.b16 %v148
    %v565 = vunpack.c.h.b16 %v148
    %v566 = vunpack.c.l.b16 %v149
    %v567 = vunpack.c.h.b16 %v149
    %v568 = vunpack.c.l.b16 %v150
    %v569 = vunpack.c.h.b16 %v150
    %v570 = vunpack.c.l.b16 %v151
    %v571 = vunpack.c.h.b16 %v151
    %v572 = vunpack.c.l.b16 %v152
    %v573 = vunpack.c.h.b16 %v152
    %v574 = vunpack.c.l.b16 %v153
    %v575 = vunpack.c.h.b16 %v153
    %v576 = vunpack.c.l.b16 %v154
    %v577 = vunpack.c.h.b16 %v154
    %v578 = vunpack.c.l.b16 %v155
    %v579 = vunpack.c.h.b16 %v155
    %v580 = vunpack.c.l.b16 %v156
    %v581 = vunpack.c.h.b16 %v156
    %v582 = vunpack.c.l.b16 %v157
    %v583 = vunpack.c.h.b16 %v157
    %v584 = vunpack.c.l.b16 %v158
    %v585 = vunpack.c.h.b16 %v158
    %v586 = vunpack.c.l.b16 %v159
    %v587 = vunpack.c.h.b16 %v159
    %v588 = vunpack.c.l.b16 %v160
    %v589 = vunpack.c.h.b16 %v160
    %v590 = vunpack.c.l.b16 %v161
    %v591 = vunpack.c.h.b16 %v161
    %v592 = vunpack.c.l.b16 %v162
    %v593 = vunpack.c.h.b16 %v162
    %v594 = vunpack.c.l.b16 %v163
    %v595 = vunpack.c.h.b16 %v163
    %v596 = vunpack.c.l.b16 %v164
    %v597 = vunpack.c.h.b16 %v164
    %v598 = vunpack.c.l.b16 %v165
    %v599 = vunpack.c.h.b16 %v165
    %v600 = vunpack.c.l.b16 %v166
    %v601 = vunpack.c.h.b16 %v166
    %v602 = vunpack.c.l.b16 %v167
    %v603 = vunpack.c.h.b16 %v167
    %v604 = vunpack.c.l.b16 %v168
    %v605 = vunpack.c.h.b16 %v168
    %v606 = vunpack.c.l.b16 %v169
    %v607 = vunpack.c.h.b16 %v169
    %v608 = vunpack.c.l.b16 %v170
    %v609 = vunpack.c.h.b16 %v170
    %v610 = vunpack.c.l.b16 %v171
    %v611 = vunpack.c.h.b16 %v171
    %v612 = vunpack.c.l.b16 %v172
    %v613 = vunpack.c.h.b16 %v172
    %v614 = vunpack.c.l.b16 %v173
    %v615 = vunpack.c.h.b16 %v173
    %v616 = vunpack.c.l.b16 %v174
    %v617 = vunpack.c.h.b16 %v174
    %v618 = vunpack.c.l.b16 %v175
    %v619 = vunpack.c.h.b16 %v175
    %v620 = vunpack.c.l.b16 %v176
    %v621 = vunpack.c.h.b16 %v176
    %v622 = vunpack.c.l.b16 %v177
    %v623 = vunpack.c.h.b16 %v177
    %v624 = vunpack.c.l.b16 %v178
    %v625 = vunpack.c.h.b16 %v178
    %v626 = vunpack.c.l.b16 %v179
    %v627 = vunpack.c.h.b16 %v179
    %v628 = vunpack.c.l.b16 %v180
    %v629 = vunpack.c.h.b16 %v180
    %v630 = vunpack.c.l.b16 %v181
    %v631 = vunpack.c.h.b16 %v181
    %v632 = vunpack.c.l.b16 %v182
    %v633 = vunpack.c.h.b16 %v182
    %v634 = vunpack.c.l.b16 %v183
    %v635 = vunpack.c.h.b16 %v183
    %v636 = vunpack.c.l.b16 %v184
    %v637 = vunpack.c.h.b16 %v184
    %v638 = vunpack.c.l.b16 %v185
    %v639 = vunpack.c.h.b16 %v185
    %v640 = vunpack.c.l.b16 %v186
    %v641 = vunpack.c.h.b16 %v186
    %v642 = vunpack.c.l.b16 %v187
    %v643 = vunpack.c.h.b16 %v187
    %v644 = vunpack.c.l.b16 %v188
    %v645 = vunpack.c.h.b16 %v188
    %v646 = vunpack.c.l.b16 %v189
    %v647 = vunpack.c.h.b16 %v189
    %v648 = vunpack.c.l.b16 %v190
    %v649 = vunpack.c.h.b16 %v190
    %v650 = vunpack.c.l.b16 %v191
    %v651 = vunpack.c.h.b16 %v191
    %v652 = vunpack.c.l.b16 %v192
    %v653 = vunpack.c.h.b16 %v192
    %v654 = vunpack.c.l.b16 %v193
    %v655 = vunpack.c.h.b16 %v193
    %v656 = vunpack.c.l.b16 %v194
    %v657 = vunpack.c.h.b16 %v194
    %v658 = vunpack.c.l.b16 %v195
    %v659 = vunpack.c.h.b16 %v195
    %v660 = vunpack.c.l.b16 %v196
    %v661 = vunpack.c.h.b16 %v196
    %v662 = vunpack.c.l.b16 %v197
    %v663 = vunpack.c.h.b16 %v197
    %v664 = vunpack.c.l.b16 %v198
    %v665 = vunpack.c.h.b16 %v198
    %v666 = vunpack.c.l.b16 %v199
    %v667 = vunpack.c.h.b16 %v199
    %v668 = vunpack.c.l.b16 %v200
    %v669 = vunpack.c.h.b16 %v200
    %v670 = vunpack.c.l.b16 %v201
    %v671 = vunpack.c.h.b16 %v201
    %v672 = vunpack.c.l.b16 %v202
    %v673 = vunpack.c.h.b16 %v202
    %v674 = vunpack.c.l.b16 %v203
    %v675 = vunpack.c.h.b16 %v203
    %v676 = vunpack.c.l.b16 %v204
    %v677 = vunpack.c.h.b16 %v204
    %v678 = vunpack.c.l.b16 %v205
    %v679 = vunpack.c.h.b16 %v205
    %v680 = vunpack.c.l.b16 %v206
    %v681 = vunpack.c.h.b16 %v206
    %v682 = vunpack.c.l.b16 %v207
    %v683 = vunpack.c.h.b16 %v207
    %v684 = vunpack.c.l.b16 %v208
    %v685 = vunpack.c.h.b16 %v208
    %v686 = vunpack.c.l.b16 %v209
    %v687 = vunpack.c.h.b16 %v209
    %v688 = vunpack.c.l.b16 %v210
    %v689 = vunpack.c.h.b16 %v210
    %v690 = vunpack.c.l.b16 %v211
    %v691 = vunpack.c.h.b16 %v211
    %v692 = vunpack.c.l.b16 %v212
    %v693 = vunpack.c.h.b16 %v212
    %v694 = vunpack.c.l.b16 %v213
    %v695 = vunpack.c.h.b16 %v213
    %v696 = vunpack.c.l.b16 %v214
    %v697 = vunpack.c.h.b16 %v214
    %v698 = vunpack.c.l.b16 %v215
    %v699 = vunpack.c.h.b16 %v215
    %v700 = vunpack.c.l.b16 %v216
    %v701 = vunpack.c.h.b16 %v216
    %v702 = vunpack.c.l.b16 %v217
    %v703 = vunpack.c.h.b16 %v217
    %v704 = vunpack.c.l.b16 %v218
    %v705 = vunpack.c.h.b16 %v218
    %v706 = vunpack.c.l.b16 %v219
    %v707 = vunpack.c.h.b16 %v219
    %v708 = vunpack.c.l.b16 %v220
    %v709 = vunpack.c.h.b16 %v220
    %v710 = vunpack.c.l.b16 %v221
    %v711 = vunpack.c.h.b16 %v221
    %v712 = vunpack.c.l.b16 %v222
    %v713 = vunpack.c.h.b16 %v222
    %v714 = vunpack.c.l.b16 %v223
    %v715 = vunpack.c.h.b16 %v223
    %v716 = vunpack.c.l.b16 %v224
    %v717 = vunpack.c.h.b16 %v224
    %v718 = vunpack.c.l.b16 %v225
    %v719 = vunpack.c.h.b16 %v225
    %v720 = vunpack.c.l.b16 %v226
    %v721 = vunpack.c.h.b16 %v226
    %v722 = vunpack.c.l.b16 %v227
    %v723 = vunpack.c.h.b16 %v227
    %v724 = vunpack.c.l.b16 %v228
    %v725 = vunpack.c.h.b16 %v228
    %v726 = vunpack.c.l.b16 %v229
    %v727 = vunpack.c.h.b16 %v229
    %v728 = vunpack.c.l.b16 %v230
    %v729 = vunpack.c.h.b16 %v230
    %v730 = vunpack.c.l.b16 %v231
    %v731 = vunpack.c.h.b16 %v231
    %v732 = vunpack.c.l.b16 %v232
    %v733 = vunpack.c.h.b16 %v232
    %v734 = vunpack.c.l.b16 %v233
    %v735 = vunpack.c.h.b16 %v233
    %v736 = vpack.c.b16 %v420, %v416
    %v737 = vpack.c.b16 %v421, %v417
    %v738 = vpack.c.b16 %v422, %v418
    %v739 = vpack.c.b16 %v423, %v419
    %v740 = vpack.c.b16 %v428, %v424
    %v741 = vpack.c.b16 %v429, %v425
    %v742 = vpack.c.b16 %v430, %v426
    %v743 = vpack.c.b16 %v431, %v427
    %v744 = vpack.c.b16 %v436, %v432
    %v745 = vpack.c.b16 %v437, %v433
    %v746 = vpack.c.b16 %v438, %v434
    %v747 = vpack.c.b16 %v439, %v435
    %v748 = vpack.c.b16 %v444, %v440
    %v749 = vpack.c.b16 %v445, %v441
    %v750 = vpack.c.b16 %v446, %v442
    %v751 = vpack.c.b16 %v447, %v443
    %v752 = vpack.c.b16 %v452, %v448
    %v753 = vpack.c.b16 %v453, %v449
    %v754 = vpack.c.b16 %v454, %v450
    %v755 = vpack.c.b16 %v455, %v451
    %v756 = vpack.c.b16 %v460, %v456
    %v757 = vpack.c.b16 %v461, %v457
    %v758 = vpack.c.b16 %v462, %v458
    %v759 = vpack.c.b16 %v463, %v459
    %v760 = vpack.c.b16 %v468, %v464
    %v761 = vpack.c.b16 %v469, %v465
    %v762 = vpack.c.b16 %v470, %v466
    %v763 = vpack.c.b16 %v471, %v467
    %v764 = vpack.c.b16 %v476, %v472
    %v765 = vpack.c.b16 %v477, %v473
    %v766 = vpack.c.b16 %v478, %v474
    %v767 = vpack.c.b16 %v479, %v475
    %v768 = vpack.c.b16 %v484, %v480
    %v769 = vpack.c.b16 %v485, %v481
    %v770 = vpack.c.b16 %v486, %v482
    %v771 = vpack.c.b16 %v487, %v483
    %v772 = vpack.c.b16 %v492, %v488
    %v773 = vpack.c.b16 %v493, %v489
    %v774 = vpack.c.b16 %v494, %v490
    %v775 = vpack.c.b16 %v495, %v491
    %v776 = vpack.c.b16 %v500, %v496
    %v777 = vpack.c.b16 %v501, %v497
    %v778 = vpack.c.b16 %v502, %v498
    %v779 = vpack.c.b16 %v503, %v499
    %v780 = vpack.c.b16 %v508, %v504
    %v781 = vpack.c.b16 %v509, %v505
    %v782 = vpack.c.b16 %v510, %v506
    %v783 = vpack.c.b16 %v511, %v507
    %v784 = vpack.c.b16 %v516, %v512
    %v785 = vpack.c.b16 %v517, %v513
    %v786 = vpack.c.b16 %v518, %v514
    %v787 = vpack.c.b16 %v519, %v515
    %v788 = vpack.c.b16 %v524, %v520
    %v789 = vpack.c.b16 %v525, %v521
    %v790 = vpack.c.b16 %v526, %v522
    %v791 = vpack.c.b16 %v527, %v523
    %v792 = vpack.c.b16 %v532, %v528
    %v793 = vpack.c.b16 %v533, %v529
    %v794 = vpack.c.b16 %v534, %v530
    %v795 = vpack.c.b16 %v535, %v531
    %v796 = vpack.c.b16 %v540, %v536
    %v797 = vpack.c.b16 %v541, %v537
    %v798 = vpack.c.b16 %v542, %v538
    %v799 = vpack.c.b16 %v543, %v539
    %v800 = vpack.c.b16 %v548, %v544
    %v801 = vpack.c.b16 %v549, %v545
    %v802 = vpack.c.b16 %v550, %v546
    %v803 = vpack.c.b16 %v551, %v547
    %v804 = vpack.c.b16 %v556, %v552
    %v805 = vpack.c.b16 %v557, %v553
    %v806 = vpack.c.b16 %v558, %v554
    %v807 = vpack.c.b16 %v559, %v555
    %v808 = vpack.c.b16 %v564, %v560
    %v809 = vpack.c.b16 %v565, %v561
    %v810 = vpack.c.b16 %v566, %v562
    %v811 = vpack.c.b16 %v567, %v563
    %v812 = vpack.c.b16 %v572, %v568
    %v813 = vpack.c.b16 %v573, %v569
    %v814 = vpack.c.b16 %v574, %v570
    %v815 = vpack.c.b16 %v575, %v571
    %v816 = vpack.c.b16 %v580, %v576
    %v817 = vpack.c.b16 %v581, %v577
    %v818 = vpack.c.b16 %v582, %v578
    %v819 = vpack.c.b16 %v583, %v579
    %v820 = vpack.c.b16 %v588, %v584
    %v821 = vpack.c.b16 %v589, %v585
    %v822 = vpack.c.b16 %v590, %v586
    %v823 = vpack.c.b16 %v591, %v587
    %v824 = vpack.c.b16 %v596, %v592
    %v825 = vpack.c.b16 %v597, %v593
    %v826 = vpack.c.b16 %v598, %v594
    %v827 = vpack.c.b16 %v599, %v595
    %v828 = vpack.c.b16 %v604, %v600
    %v829 = vpack.c.b16 %v605, %v601
    %v830 = vpack.c.b16 %v606, %v602
    %v831 = vpack.c.b16 %v607, %v603
    %v832 = vpack.c.b16 %v612, %v608
    %v833 = vpack.c.b16 %v613, %v609
    %v834 = vpack.c.b16 %v614, %v610
    %v835 = vpack.c.b16 %v615, %v611
    %v836 = vpack.c.b16 %v620, %v616
    %v837 = vpack.c.b16 %v621, %v617
    %v838 = vpack.c.b16 %v622, %v618
    %v839 = vpack.c.b16 %v623, %v619
    %v840 = vpack.c.b16 %v628, %v624
    %v841 = vpack.c.b16 %v629, %v625
    %v842 = vpack.c.b16 %v630, %v626
    %v843 = vpack.c.b16 %v631, %v627
    %v844 = vpack.c.b16 %v636, %v632
    %v845 = vpack.c.b16 %v637, %v633
    %v846 = vpack.c.b16 %v638, %v634
    %v847 = vpack.c.b16 %v639, %v635
    %v848 = vpack.c.b16 %v644, %v640
    %v849 = vpack.c.b16 %v645, %v641
    %v850 = vpack.c.b16 %v646, %v642
    %v851 = vpack.c.b16 %v647, %v643
    %v852 = vpack.c.b16 %v652, %v648
    %v853 = vpack.c.b16 %v653, %v649
    %v854 = vpack.c.b16 %v654, %v650
    %v855 = vpack.c.b16 %v655, %v651
    %v856 = vpack.c.b16 %v660, %v656
    %v857 = vpack.c.b16 %v661, %v657
    %v858 = vpack.c.b16 %v662, %v658
    %v859 = vpack.c.b16 %v663, %v659
    %v860 = vpack.c.b16 %v668, %v664
    %v861 = vpack.c.b16 %v669, %v665
    %v862 = vpack.c.b16 %v670, %v666
    %v863 = vpack.c.b16 %v671, %v667
    %v864 = vpack.c.b16 %v676, %v672
    %v865 = vpack.c.b16 %v677, %v673
    %v866 = vpack.c.b16 %v678, %v674
    %v867 = vpack.c.b16 %v679, %v675
    %v868 = vpack.c.b16 %v684, %v680
    %v869 = vpack.c.b16 %v685, %v681
    %v870 = vpack.c.b16 %v686, %v682
    %v871 = vpack.c.b16 %v687, %v683
    %v872 = vpack.c.b16 %v692, %v688
    %v873 = vpack.c.b16 %v693, %v689
    %v874 = vpack.c.b16 %v694, %v690
    %v875 = vpack.c.b16 %v695, %v691
    %v876 = vpack.c.b16 %v700, %v696
    %v877 = vpack.c.b16 %v701, %v697
    %v878 = vpack.c.b16 %v702, %v698
    %v879 = vpack.c.b16 %v703, %v699
    %v880 = vpack.c.b16 %v708, %v704
    %v881 = vpack.c.b16 %v709, %v705
    %v882 = vpack.c.b16 %v710, %v706
    %v883 = vpack.c.b16 %v711, %v707
    %v884 = vpack.c.b16 %v716, %v712
    %v885 = vpack.c.b16 %v717, %v713
    %v886 = vpack.c.b16 %v718, %v714
    %v887 = vpack.c.b16 %v719, %v715
    %v888 = vpack.c.b16 %v724, %v720
    %v889 = vpack.c.b16 %v725, %v721
    %v890 = vpack.c.b16 %v726, %v722
    %v891 = vpack.c.b16 %v727, %v723
    %v892 = vpack.c.b16 %v732, %v728
    %v893 = vpack.c.b16 %v733, %v729
    %v894 = vpack.c.b16 %v734, %v730
    %v895 = vpack.c.b16 %v735, %v731
    %1056 = vmatprep.subr.bf16.mxu0 %v737
    %1057 = vmatpush1.bf16.msra.mxu0 %v736
    %1058 = vmatprep.subr.bf16.mxu0 %v741
    %1059 = vmatpush1.bf16.msra.mxu0 %v740
    %1060 = vmatprep.subr.bf16.mxu0 %v745
    %1061 = vmatpush1.bf16.msra.mxu0 %v744
    %1062 = vmatprep.subr.bf16.mxu0 %v749
    %1063 = vmatpush1.bf16.msra.mxu0 %v748
    %1064 = vmatprep.subr.bf16.mxu0 %v753
    %1065 = vmatpush1.bf16.msra.mxu0 %v752
    %1066 = vmatprep.subr.bf16.mxu0 %v757
    %1067 = vmatpush1.bf16.msra.mxu0 %v756
    %1068 = vmatprep.subr.bf16.mxu0 %v761
    %1069 = vmatpush1.bf16.msra.mxu0 %v760
    %1070 = vmatprep.subr.bf16.mxu0 %v765
    %1071 = vmatpush1.bf16.msra.mxu0 %v764
    %1072 = vmatprep.subr.bf16.mxu0 %v769
    %1073 = vmatpush1.bf16.msra.mxu0 %v768
    %1074 = vmatprep.subr.bf16.mxu0 %v773
    %1075 = vmatpush1.bf16.msra.mxu0 %v772
    %1076 = vmatprep.subr.bf16.mxu0 %v777
    %1077 = vmatpush1.bf16.msra.mxu0 %v776
    %1078 = vmatprep.subr.bf16.mxu0 %v781
    %1079 = vmatpush1.bf16.msra.mxu0 %v780
    %1080 = vmatprep.subr.bf16.mxu0 %v785
    %1081 = vmatpush1.bf16.msra.mxu0 %v784
    %1082 = vmatprep.subr.bf16.mxu0 %v789
    %1083 = vmatpush1.bf16.msra.mxu0 %v788
    %1084 = vmatprep.subr.bf16.mxu0 %v793
    %1085 = vmatpush1.bf16.msra.mxu0 %v792
    %1086 = vmatprep.subr.bf16.mxu0 %v797
    %1087 = vmatpush1.bf16.msra.mxu0 %v796
    %1088 = vmatprep.mubr.bf16.mxu0 %v70
    %1089 = vmatmul.mubr.bf16.gmra.mrb[0].mxu0 %v69
    %v1090 = vpop.f32.mrb[0].mxu0
    %v1091 = vadd.f32 %v239, %v1090
    %v1092 = vpop.f32.mrb[0].mxu0
    %v1093 = vadd.f32 %v243, %v1092
    %v1094 = vpop.f32.mrb[0].mxu0
    %v1095 = vpop.f32.mrb[0].mxu0
    %1096 = vdwg.mxu0
    %1097 = vmatprep.subr.bf16.mxu0 %v801
    %1098 = vmatpush1.bf16.msra.mxu0 %v800
    %1099 = vmatprep.subr.bf16.mxu0 %v805
    %1100 = vmatpush1.bf16.msra.mxu0 %v804
    %1101 = vmatprep.subr.bf16.mxu0 %v809
    %1102 = vmatpush1.bf16.msra.mxu0 %v808
    %1103 = vmatprep.subr.bf16.mxu0 %v813
    %1104 = vmatpush1.bf16.msra.mxu0 %v812
    %1105 = vmatprep.subr.bf16.mxu0 %v817
    %1106 = vmatpush1.bf16.msra.mxu0 %v816
    %1107 = vmatprep.subr.bf16.mxu0 %v821
    %1108 = vmatpush1.bf16.msra.mxu0 %v820
    %1109 = vmatprep.subr.bf16.mxu0 %v825
    %1110 = vmatpush1.bf16.msra.mxu0 %v824
    %1111 = vmatprep.subr.bf16.mxu0 %v829
    %1112 = vmatpush1.bf16.msra.mxu0 %v828
    %1113 = vmatprep.subr.bf16.mxu0 %v833
    %1114 = vmatpush1.bf16.msra.mxu0 %v832
    %1115 = vmatprep.subr.bf16.mxu0 %v837
    %1116 = vmatpush1.bf16.msra.mxu0 %v836
    %1117 = vmatprep.subr.bf16.mxu0 %v841
    %1118 = vmatpush1.bf16.msra.mxu0 %v840
    %1119 = vmatprep.subr.bf16.mxu0 %v845
    %1120 = vmatpush1.bf16.msra.mxu0 %v844
    %1121 = vmatprep.subr.bf16.mxu0 %v849
    %1122 = vmatpush1.bf16.msra.mxu0 %v848
    %1123 = vmatprep.subr.bf16.mxu0 %v853
    %1124 = vmatpush1.bf16.msra.mxu0 %v852
    %1125 = vmatprep.subr.bf16.mxu0 %v857
    %1126 = vmatpush1.bf16.msra.mxu0 %v856
    %1127 = vmatprep.subr.bf16.mxu0 %v861
    %1128 = vmatpush1.bf16.msra.mxu0 %v860
    %1129 = vmatprep.mubr.bf16.mxu0 %v72
    %1130 = vmatmul.mubr.bf16.gmra.mrb[0].mxu0 %v71
    %v1131 = vpop.f32.mrb[0].mxu0
    %v1132 = vadd.f32 %v1091, %v1131
    %v1133 = vpop.f32.mrb[0].mxu0
    %v1134 = vadd.f32 %v1093, %v1133
    %v1135 = vpop.f32.mrb[0].mxu0
    %v1136 = vpop.f32.mrb[0].mxu0
    %1137 = vdwg.mxu0
    %1138 = vmatprep.subr.bf16.mxu0 %v865
    %1139 = vmatpush1.bf16.msra.mxu0 %v864
    %1140 = vmatprep.subr.bf16.mxu0 %v869
    %1141 = vmatpush1.bf16.msra.mxu0 %v868
    %1142 = vmatprep.subr.bf16.mxu0 %v873
    %1143 = vmatpush1.bf16.msra.mxu0 %v872
    %1144 = vmatprep.subr.bf16.mxu0 %v877
    %1145 = vmatpush1.bf16.msra.mxu0 %v876
    %1146 = vmatprep.subr.bf16.mxu0 %v881
    %1147 = vmatpush1.bf16.msra.mxu0 %v880
    %1148 = vmatprep.subr.bf16.mxu0 %v885
    %1149 = vmatpush1.bf16.msra.mxu0 %v884
    %1150 = vmatprep.subr.bf16.mxu0 %v889
    %1151 = vmatpush1.bf16.msra.mxu0 %v888
    %1152 = vmatprep.subr.bf16.mxu0 %v893
    %1153 = vmatpush1.bf16.msra.mxu0 %v892
    %1154 = vmatprep.subr.bf16.mxu0 0
    %1155 = vmatpush1.bf16.msra.mxu0 0
    %1156 = vmatprep.subr.bf16.mxu0 0
    %1157 = vmatpush1.bf16.msra.mxu0 0
    %1158 = vmatprep.subr.bf16.mxu0 0
    %1159 = vmatpush1.bf16.msra.mxu0 0
    %1160 = vmatprep.subr.bf16.mxu0 0
    %1161 = vmatpush1.bf16.msra.mxu0 0
    %1162 = vmatprep.subr.bf16.mxu0 0
    %1163 = vmatpush1.bf16.msra.mxu0 0
    %1164 = vmatprep.subr.bf16.mxu0 0
    %1165 = vmatpush1.bf16.msra.mxu0 0
    %1166 = vmatprep.subr.bf16.mxu0 0
    %1167 = vmatpush1.bf16.msra.mxu0 0
    %1168 = vmatprep.subr.bf16.mxu0 0
    %1169 = vmatpush1.bf16.msra.mxu0 0
    %1170 = vmatprep.mubr.bf16.mxu0 0
    %1171 = vmatmul.mubr.bf16.gmra.mrb[0].mxu0 %v73
    %v1172 = vpop.f32.mrb[0].mxu0
    %v1173 = vadd.f32 %v1132, %v1172
    %v1174 = vpop.f32.mrb[0].mxu0
    %v1175 = vadd.f32 %v1134, %v1174
    %v1176 = vpop.f32.mrb[0].mxu0
    %v1177 = vpop.f32.mrb[0].mxu0
    %1178 = vdwg.mxu0
    %1179 = vmatprep.subr.bf16.mxu0 %v739
    %1180 = vmatpush1.bf16.msra.mxu0 %v738
    %1181 = vmatprep.subr.bf16.mxu0 %v743
    %1182 = vmatpush1.bf16.msra.mxu0 %v742
    %1183 = vmatprep.subr.bf16.mxu0 %v747
    %1184 = vmatpush1.bf16.msra.mxu0 %v746
    %1185 = vmatprep.subr.bf16.mxu0 %v751
    %1186 = vmatpush1.bf16.msra.mxu0 %v750
    %1187 = vmatprep.subr.bf16.mxu0 %v755
    %1188 = vmatpush1.bf16.msra.mxu0 %v754
    %1189 = vmatprep.subr.bf16.mxu0 %v759
    %1190 = vmatpush1.bf16.msra.mxu0 %v758
    %1191 = vmatprep.subr.bf16.mxu0 %v763
    %1192 = vmatpush1.bf16.msra.mxu0 %v762
    %1193 = vmatprep.subr.bf16.mxu0 %v767
    %1194 = vmatpush1.bf16.msra.mxu0 %v766
    %1195 = vmatprep.subr.bf16.mxu0 %v771
    %1196 = vmatpush1.bf16.msra.mxu0 %v770
    %1197 = vmatprep.subr.bf16.mxu0 %v775
    %1198 = vmatpush1.bf16.msra.mxu0 %v774
    %1199 = vmatprep.subr.bf16.mxu0 %v779
    %1200 = vmatpush1.bf16.msra.mxu0 %v778
    %1201 = vmatprep.subr.bf16.mxu0 %v783
    %1202 = vmatpush1.bf16.msra.mxu0 %v782
    %1203 = vmatprep.subr.bf16.mxu0 %v787
    %1204 = vmatpush1.bf16.msra.mxu0 %v786
    %1205 = vmatprep.subr.bf16.mxu0 %v791
    %1206 = vmatpush1.bf16.msra.mxu0 %v790
    %1207 = vmatprep.subr.bf16.mxu0 %v795
    %1208 = vmatpush1.bf16.msra.mxu0 %v794
    %1209 = vmatprep.subr.bf16.mxu0 %v799
    %1210 = vmatpush1.bf16.msra.mxu0 %v798
    %1211 = vmatprep.mubr.bf16.mxu0 %v70
    %1212 = vmatmul.mubr.bf16.gmra.mrb[0].mxu0 %v69
    %v1213 = vpop.f32.mrb[0].mxu0
    %v1214 = vadd.f32 %v247, %v1213
    %v1215 = vpop.f32.mrb[0].mxu0
    %v1216 = vadd.f32 %v251, %v1215
    %v1217 = vpop.f32.mrb[0].mxu0
    %v1218 = vpop.f32.mrb[0].mxu0
    %1219 = vdwg.mxu0
    %1220 = vmatprep.subr.bf16.mxu0 %v803
    %1221 = vmatpush1.bf16.msra.mxu0 %v802
    %1222 = vmatprep.subr.bf16.mxu0 %v807
    %1223 = vmatpush1.bf16.msra.mxu0 %v806
    %1224 = vmatprep.subr.bf16.mxu0 %v811
    %1225 = vmatpush1.bf16.msra.mxu0 %v810
    %1226 = vmatprep.subr.bf16.mxu0 %v815
    %1227 = vmatpush1.bf16.msra.mxu0 %v814
    %1228 = vmatprep.subr.bf16.mxu0 %v819
    %1229 = vmatpush1.bf16.msra.mxu0 %v818
    %1230 = vmatprep.subr.bf16.mxu0 %v823
    %1231 = vmatpush1.bf16.msra.mxu0 %v822
    %1232 = vmatprep.subr.bf16.mxu0 %v827
    %1233 = vmatpush1.bf16.msra.mxu0 %v826
    %1234 = vmatprep.subr.bf16.mxu0 %v831
    %1235 = vmatpush1.bf16.msra.mxu0 %v830
    %1236 = vmatprep.subr.bf16.mxu0 %v835
    %1237 = vmatpush1.bf16.msra.mxu0 %v834
    %1238 = vmatprep.subr.bf16.mxu0 %v839
    %1239 = vmatpush1.bf16.msra.mxu0 %v838
    %1240 = vmatprep.subr.bf16.mxu0 %v843
    %1241 = vmatpush1.bf16.msra.mxu0 %v842
    %1242 = vmatprep.subr.bf16.mxu0 %v847
    %1243 = vmatpush1.bf16.msra.mxu0 %v846
    %1244 = vmatprep.subr.bf16.mxu0 %v851
    %1245 = vmatpush1.bf16.msra.mxu0 %v850
    %1246 = vmatprep.subr.bf16.mxu0 %v855
    %1247 = vmatpush1.bf16.msra.mxu0 %v854
    %1248 = vmatprep.subr.bf16.mxu0 %v859
    %1249 = vmatpush1.bf16.msra.mxu0 %v858
    %1250 = vmatprep.subr.bf16.mxu0 %v863
    %1251 = vmatpush1.bf16.msra.mxu0 %v862
    %1252 = vmatprep.mubr.bf16.mxu0 %v72
    %1253 = vmatmul.mubr.bf16.gmra.mrb[0].mxu0 %v71
    %v1254 = vpop.f32.mrb[0].mxu0
    %v1255 = vadd.f32 %v1214, %v1254
    %v1256 = vpop.f32.mrb[0].mxu0
    %v1257 = vadd.f32 %v1216, %v1256
    %v1258 = vpop.f32.mrb[0].mxu0
    %v1259 = vpop.f32.mrb[0].mxu0
    %1260 = vdwg.mxu0
    %1261 = vmatprep.subr.bf16.mxu0 %v867
    %1262 = vmatpush1.bf16.msra.mxu0 %v866
    %1263 = vmatprep.subr.bf16.mxu0 %v871
    %1264 = vmatpush1.bf16.msra.mxu0 %v870
    %1265 = vmatprep.subr.bf16.mxu0 %v875
    %1266 = vmatpush1.bf16.msra.mxu0 %v874
    %1267 = vmatprep.subr.bf16.mxu0 %v879
    %1268 = vmatpush1.bf16.msra.mxu0 %v878
    %1269 = vmatprep.subr.bf16.mxu0 %v883
    %1270 = vmatpush1.bf16.msra.mxu0 %v882
    %1271 = vmatprep.subr.bf16.mxu0 %v887
    %1272 = vmatpush1.bf16.msra.mxu0 %v886
    %1273 = vmatprep.subr.bf16.mxu0 %v891
    %1274 = vmatpush1.bf16.msra.mxu0 %v890
    %1275 = vmatprep.subr.bf16.mxu0 %v895
    %1276 = vmatpush1.bf16.msra.mxu0 %v894
    %1277 = vmatprep.subr.bf16.mxu0 0
    %1278 = vmatpush1.bf16.msra.mxu0 0
    %1279 = vmatprep.subr.bf16.mxu0 0
    %1280 = vmatpush1.bf16.msra.mxu0 0
    %1281 = vmatprep.subr.bf16.mxu0 0
    %1282 = vmatpush1.bf16.msra.mxu0 0
    %1283 = vmatprep.subr.bf16.mxu0 0
    %1284 = vmatpush1.bf16.msra.mxu0 0
    %1285 = vmatprep.subr.bf16.mxu0 0
    %1286 = vmatpush1.bf16.msra.mxu0 0
    %1287 = vmatprep.subr.bf16.mxu0 0
    %1288 = vmatpush1.bf16.msra.mxu0 0
    %1289 = vmatprep.subr.bf16.mxu0 0
    %1290 = vmatpush1.bf16.msra.mxu0 0
    %1291 = vmatprep.subr.bf16.mxu0 0
    %1292 = vmatpush1.bf16.msra.mxu0 0
    %1293 = vmatprep.mubr.bf16.mxu0 0
    %1294 = vmatmul.mubr.bf16.gmra.mrb[0].mxu0 %v73
    %v1295 = vpop.f32.mrb[0].mxu0
    %v1296 = vadd.f32 %v1255, %v1295
    %v1297 = vpop.f32.mrb[0].mxu0
    %v1298 = vadd.f32 %v1257, %v1297
    %v1299 = vpop.f32.mrb[0].mxu0
    %v1300 = vpop.f32.mrb[0].mxu0
    %1301 = vdwg.mxu0
    %v1302 = vmax.f32 %v1173, 0.0
    %v1303 = vmax.f32 %v1175, 0.0
    %v1304 = vmax.f32 %v1296, 0.0
    %v1305 = vmax.f32 %v1298, 0.0
    %v1306 = vpack.c.bf16 %v1302, %v1302
    %v1307 = vpack.c.bf16 %v1303, %v1303
    %v1308 = vpack.c.bf16 %v1304, %v1304
    %v1309 = vpack.c.bf16 %v1305, %v1305
    %v1310 = vld [vmem:[%s3] sm:$0xf]
    %v1311 = vld [vmem:[%s3 + $0x4] sm:$0xf]
    %v1312 = vld [vmem:[%s3 + $0x8] sm:$0xf]
    %v1313 = vld [vmem:[%s3 + $0xc] sm:$0xf]
    %v1314 = vld [vmem:[%s3 + $0x10] sm:$0xf]
    %v1315 = vld [vmem:[%s3 + $0x14] sm:$0xf]
    %v1316 = vld [vmem:[%s3 + $0x18] sm:$0xf]
    %v1317 = vld [vmem:[%s3 + $0x1c] sm:$0xf]
    %v1318 = vld [vmem:[%s3 + $0x20] sm:$0xf]
    %v1319 = vld [vmem:[%s3 + $0x24] sm:$0xf]
    %v1320 = vld [vmem:[%s3 + $0x28] sm:$0xf]
    %v1321 = vld [vmem:[%s3 + $0x2c] sm:$0xf]
    %v1322 = vld [vmem:[%s3 + $0x30] sm:$0xf]
    %v1323 = vld [vmem:[%s3 + $0x34] sm:$0xf]
    %v1324 = vld [vmem:[%s3 + $0x38] sm:$0xf]
    %v1325 = vld [vmem:[%s3 + $0x3c] sm:$0xf]
    %v1326 = vld [vmem:[%s3 + $0x40] sm:$0xf]
    %v1327 = vld [vmem:[%s3 + $0x44] sm:$0xf]
    %v1328 = vld [vmem:[%s3 + $0x48] sm:$0xf]
    %v1329 = vld [vmem:[%s3 + $0x4c] sm:$0xf]
    %v1330 = vld [vmem:[%s3 + $0x50] sm:$0xf]
    %v1331 = vld [vmem:[%s3 + $0x54] sm:$0xf]
    %v1332 = vld [vmem:[%s3 + $0x58] sm:$0xf]
    %v1333 = vld [vmem:[%s3 + $0x5c] sm:$0xf]
    %v1334 = vld [vmem:[%s3 + $0x60] sm:$0xf]
    %v1335 = vld [vmem:[%s3 + $0x64] sm:$0xf]
    %v1336 = vld [vmem:[%s3 + $0x68] sm:$0xf]
    %v1337 = vld [vmem:[%s3 + $0x6c] sm:$0xf]
    %v1338 = vld [vmem:[%s3 + $0x70] sm:$0xf]
    %v1339 = vld [vmem:[%s3 + $0x74] sm:$0xf]
    %v1340 = vld [vmem:[%s3 + $0x78] sm:$0xf]
    %v1341 = vld [vmem:[%s3 + $0x7c] sm:$0xf]
    %v1342 = vld [vmem:[%s3 + $0x80] sm:$0xf]
    %v1343 = vld [vmem:[%s3 + $0x84] sm:$0xf]
    %v1344 = vld [vmem:[%s3 + $0x88] sm:$0xf]
    %v1345 = vld [vmem:[%s3 + $0x8c] sm:$0xf]
    %v1346 = vld [vmem:[%s3 + $0x90] sm:$0xf]
    %v1347 = vld [vmem:[%s3 + $0x94] sm:$0xf]
    %v1348 = vld [vmem:[%s3 + $0x98] sm:$0xf]
    %v1349 = vld [vmem:[%s3 + $0x9c] sm:$0xf]
    %v1350 = vld [vmem:[%s3 + $0xa0] sm:$0xf]
    %v1351 = vld [vmem:[%s3 + $0xa4] sm:$0xf]
    %v1352 = vld [vmem:[%s3 + $0xa8] sm:$0xf]
    %v1353 = vld [vmem:[%s3 + $0xac] sm:$0xf]
    %v1354 = vld [vmem:[%s3 + $0xb0] sm:$0xf]
    %v1355 = vld [vmem:[%s3 + $0xb4] sm:$0xf]
    %v1356 = vld [vmem:[%s3 + $0xb8] sm:$0xf]
    %v1357 = vld [vmem:[%s3 + $0xbc] sm:$0xf]
    %v1358 = vld [vmem:[%s3 + $0xc0] sm:$0xf]
    %v1359 = vld [vmem:[%s3 + $0xc4] sm:$0xf]
    %v1360 = vld [vmem:[%s3 + $0xc8] sm:$0xf]
    %v1361 = vld [vmem:[%s3 + $0xcc] sm:$0xf]
    %v1362 = vld [vmem:[%s3 + $0xd0] sm:$0xf]
    %v1363 = vld [vmem:[%s3 + $0xd4] sm:$0xf]
    %v1364 = vld [vmem:[%s3 + $0xd8] sm:$0xf]
    %v1365 = vld [vmem:[%s3 + $0xdc] sm:$0xf]
    %v1366 = vld [vmem:[%s3 + $0xe0] sm:$0xf]
    %v1367 = vld [vmem:[%s3 + $0xe4] sm:$0xf]
    %v1368 = vld [vmem:[%s3 + $0xe8] sm:$0xf]
    %v1369 = vld [vmem:[%s3 + $0xec] sm:$0xf]
    %v1370 = vld [vmem:[%s3 + $0xf0] sm:$0xf]
    %v1371 = vld [vmem:[%s3 + $0xf4] sm:$0xf]
    %v1372 = vld [vmem:[%s3 + $0xf8] sm:$0xf]
    %v1373 = vld [vmem:[%s3 + $0xfc] sm:$0xf]
    %v1374 = vld [vmem:[%s4] sm:$0x1]
    %v1376 = vlaneseq
    %v1377 = vshrl.u32 %v1376, 7
    %v1378 = vsub.s32 0, %v1377
    %v1379 = vrot.slane %v1374, %v1378
    %v1445 = vunpack.c.l.b16 %v1310
    %v1446 = vunpack.c.l.b16 %v1311
    %v1447 = vunpack.c.l.b16 %v1312
    %v1448 = vunpack.c.l.b16 %v1313
    %v1449 = vunpack.c.l.b16 %v1314
    %v1450 = vunpack.c.l.b16 %v1315
    %v1451 = vunpack.c.l.b16 %v1316
    %v1452 = vunpack.c.l.b16 %v1317
    %v1453 = vunpack.c.l.b16 %v1318
    %v1454 = vunpack.c.l.b16 %v1319
    %v1455 = vunpack.c.l.b16 %v1320
    %v1456 = vunpack.c.l.b16 %v1321
    %v1457 = vunpack.c.l.b16 %v1322
    %v1458 = vunpack.c.l.b16 %v1323
    %v1459 = vunpack.c.l.b16 %v1324
    %v1460 = vunpack.c.l.b16 %v1325
    %v1461 = vunpack.c.l.b16 %v1326
    %v1462 = vunpack.c.l.b16 %v1327
    %v1463 = vunpack.c.l.b16 %v1328
    %v1464 = vunpack.c.l.b16 %v1329
    %v1465 = vunpack.c.l.b16 %v1330
    %v1466 = vunpack.c.l.b16 %v1331
    %v1467 = vunpack.c.l.b16 %v1332
    %v1468 = vunpack.c.l.b16 %v1333
    %v1469 = vunpack.c.l.b16 %v1334
    %v1470 = vunpack.c.l.b16 %v1335
    %v1471 = vunpack.c.l.b16 %v1336
    %v1472 = vunpack.c.l.b16 %v1337
    %v1473 = vunpack.c.l.b16 %v1338
    %v1474 = vunpack.c.l.b16 %v1339
    %v1475 = vunpack.c.l.b16 %v1340
    %v1476 = vunpack.c.l.b16 %v1341
    %v1477 = vunpack.c.l.b16 %v1342
    %v1478 = vunpack.c.l.b16 %v1343
    %v1479 = vunpack.c.l.b16 %v1344
    %v1480 = vunpack.c.l.b16 %v1345
    %v1481 = vunpack.c.l.b16 %v1346
    %v1482 = vunpack.c.l.b16 %v1347
    %v1483 = vunpack.c.l.b16 %v1348
    %v1484 = vunpack.c.l.b16 %v1349
    %v1485 = vunpack.c.l.b16 %v1350
    %v1486 = vunpack.c.l.b16 %v1351
    %v1487 = vunpack.c.l.b16 %v1352
    %v1488 = vunpack.c.l.b16 %v1353
    %v1489 = vunpack.c.l.b16 %v1354
    %v1490 = vunpack.c.l.b16 %v1355
    %v1491 = vunpack.c.l.b16 %v1356
    %v1492 = vunpack.c.l.b16 %v1357
    %v1493 = vunpack.c.l.b16 %v1358
    %v1494 = vunpack.c.l.b16 %v1359
    %v1495 = vunpack.c.l.b16 %v1360
    %v1496 = vunpack.c.l.b16 %v1361
    %v1497 = vunpack.c.l.b16 %v1362
    %v1498 = vunpack.c.l.b16 %v1363
    %v1499 = vunpack.c.l.b16 %v1364
    %v1500 = vunpack.c.l.b16 %v1365
    %v1501 = vunpack.c.l.b16 %v1366
    %v1502 = vunpack.c.l.b16 %v1367
    %v1503 = vunpack.c.l.b16 %v1368
    %v1504 = vunpack.c.l.b16 %v1369
    %v1505 = vunpack.c.l.b16 %v1370
    %v1506 = vunpack.c.l.b16 %v1371
    %v1507 = vunpack.c.l.b16 %v1372
    %v1508 = vunpack.c.l.b16 %v1373
    %v1509 = vpack.c.b16 %v1446, %v1445
    %v1510 = vpack.c.b16 %v1448, %v1447
    %v1511 = vpack.c.b16 %v1450, %v1449
    %v1512 = vpack.c.b16 %v1452, %v1451
    %v1513 = vpack.c.b16 %v1454, %v1453
    %v1514 = vpack.c.b16 %v1456, %v1455
    %v1515 = vpack.c.b16 %v1458, %v1457
    %v1516 = vpack.c.b16 %v1460, %v1459
    %v1517 = vpack.c.b16 %v1462, %v1461
    %v1518 = vpack.c.b16 %v1464, %v1463
    %v1519 = vpack.c.b16 %v1466, %v1465
    %v1520 = vpack.c.b16 %v1468, %v1467
    %v1521 = vpack.c.b16 %v1470, %v1469
    %v1522 = vpack.c.b16 %v1472, %v1471
    %v1523 = vpack.c.b16 %v1474, %v1473
    %v1524 = vpack.c.b16 %v1476, %v1475
    %v1525 = vpack.c.b16 %v1478, %v1477
    %v1526 = vpack.c.b16 %v1480, %v1479
    %v1527 = vpack.c.b16 %v1482, %v1481
    %v1528 = vpack.c.b16 %v1484, %v1483
    %v1529 = vpack.c.b16 %v1486, %v1485
    %v1530 = vpack.c.b16 %v1488, %v1487
    %v1531 = vpack.c.b16 %v1490, %v1489
    %v1532 = vpack.c.b16 %v1492, %v1491
    %v1533 = vpack.c.b16 %v1494, %v1493
    %v1534 = vpack.c.b16 %v1496, %v1495
    %v1535 = vpack.c.b16 %v1498, %v1497
    %v1536 = vpack.c.b16 %v1500, %v1499
    %v1537 = vpack.c.b16 %v1502, %v1501
    %v1538 = vpack.c.b16 %v1504, %v1503
    %v1539 = vpack.c.b16 %v1506, %v1505
    %v1540 = vpack.c.b16 %v1508, %v1507
    %1573 = vmatprep.subr.bf16.mxu0 0
    %1574 = vmatpush1.bf16.msra.mxu0 %v1509
    %1575 = vmatprep.subr.bf16.mxu0 0
    %1576 = vmatpush1.bf16.msra.mxu0 %v1510
    %1577 = vmatprep.subr.bf16.mxu0 0
    %1578 = vmatpush1.bf16.msra.mxu0 %v1511
    %1579 = vmatprep.subr.bf16.mxu0 0
    %1580 = vmatpush1.bf16.msra.mxu0 %v1512
    %1581 = vmatprep.subr.bf16.mxu0 0
    %1582 = vmatpush1.bf16.msra.mxu0 %v1513
    %1583 = vmatprep.subr.bf16.mxu0 0
    %1584 = vmatpush1.bf16.msra.mxu0 %v1514
    %1585 = vmatprep.subr.bf16.mxu0 0
    %1586 = vmatpush1.bf16.msra.mxu0 %v1515
    %1587 = vmatprep.subr.bf16.mxu0 0
    %1588 = vmatpush1.bf16.msra.mxu0 %v1516
    %1589 = vmatprep.subr.bf16.mxu0 0
    %1590 = vmatpush1.bf16.msra.mxu0 %v1517
    %1591 = vmatprep.subr.bf16.mxu0 0
    %1592 = vmatpush1.bf16.msra.mxu0 %v1518
    %1593 = vmatprep.subr.bf16.mxu0 0
    %1594 = vmatpush1.bf16.msra.mxu0 %v1519
    %1595 = vmatprep.subr.bf16.mxu0 0
    %1596 = vmatpush1.bf16.msra.mxu0 %v1520
    %1597 = vmatprep.subr.bf16.mxu0 0
    %1598 = vmatpush1.bf16.msra.mxu0 %v1521
    %1599 = vmatprep.subr.bf16.mxu0 0
    %1600 = vmatpush1.bf16.msra.mxu0 %v1522
    %1601 = vmatprep.subr.bf16.mxu0 0
    %1602 = vmatpush1.bf16.msra.mxu0 %v1523
    %1603 = vmatprep.subr.bf16.mxu0 0
    %1604 = vmatpush1.bf16.msra.mxu0 %v1524
    %1605 = vmatprep.mubr.bf16.mxu0 %v1307
    %1606 = vmatmul.mubr.bf16.gmra.mrb[0].mxu0 %v1306
    %v1607 = vpop.f32.mrb[0].mxu0
    %v1608 = vadd.f32 %v1379, %v1607
    %v1609 = vpop.f32.mrb[0].mxu0
    %v1610 = vpop.f32.mrb[0].mxu0
    %v1611 = vpop.f32.mrb[0].mxu0
    %1612 = vdwg.mxu0
    %1613 = vmatprep.subr.bf16.mxu0 0
    %1614 = vmatpush1.bf16.msra.mxu0 %v1525
    %1615 = vmatprep.subr.bf16.mxu0 0
    %1616 = vmatpush1.bf16.msra.mxu0 %v1526
    %1617 = vmatprep.subr.bf16.mxu0 0
    %1618 = vmatpush1.bf16.msra.mxu0 %v1527
    %1619 = vmatprep.subr.bf16.mxu0 0
    %1620 = vmatpush1.bf16.msra.mxu0 %v1528
    %1621 = vmatprep.subr.bf16.mxu0 0
    %1622 = vmatpush1.bf16.msra.mxu0 %v1529
    %1623 = vmatprep.subr.bf16.mxu0 0
    %1624 = vmatpush1.bf16.msra.mxu0 %v1530
    %1625 = vmatprep.subr.bf16.mxu0 0
    %1626 = vmatpush1.bf16.msra.mxu0 %v1531
    %1627 = vmatprep.subr.bf16.mxu0 0
    %1628 = vmatpush1.bf16.msra.mxu0 %v1532
    %1629 = vmatprep.subr.bf16.mxu0 0
    %1630 = vmatpush1.bf16.msra.mxu0 %v1533
    %1631 = vmatprep.subr.bf16.mxu0 0
    %1632 = vmatpush1.bf16.msra.mxu0 %v1534
    %1633 = vmatprep.subr.bf16.mxu0 0
    %1634 = vmatpush1.bf16.msra.mxu0 %v1535
    %1635 = vmatprep.subr.bf16.mxu0 0
    %1636 = vmatpush1.bf16.msra.mxu0 %v1536
    %1637 = vmatprep.subr.bf16.mxu0 0
    %1638 = vmatpush1.bf16.msra.mxu0 %v1537
    %1639 = vmatprep.subr.bf16.mxu0 0
    %1640 = vmatpush1.bf16.msra.mxu0 %v1538
    %1641 = vmatprep.subr.bf16.mxu0 0
    %1642 = vmatpush1.bf16.msra.mxu0 %v1539
    %1643 = vmatprep.subr.bf16.mxu0 0
    %1644 = vmatpush1.bf16.msra.mxu0 %v1540
    %1645 = vmatprep.mubr.bf16.mxu0 %v1309
    %1646 = vmatmul.mubr.bf16.gmra.mrb[0].mxu0 %v1308
    %v1647 = vpop.f32.mrb[0].mxu0
    %v1648 = vadd.f32 %v1608, %v1647
    %v1649 = vpop.f32.mrb[0].mxu0
    %v1650 = vpop.f32.mrb[0].mxu0
    %v1651 = vpop.f32.mrb[0].mxu0
    %1652 = vdwg.mxu0
    %vm1653 = vcmask 254976
    %1654 = vst.msk [vmem:[#allocation5] sm:$0x3] %vm1653, %v1648
    // Predicated region
    $region26: #{tpu_custom_call.1} parent=1 // pred_check
      _
    $region27: #{tpu_custom_call.1} parent=1 // pred_check_branch
      %1656 = sbr.rel (0) target = $region29
    $region28: #{tpu_custom_call.1} parent=1 // pred_region
      %s1658 = ssub.s32 32, 32
      %1659 = vsyncadd [#allocation4], %s1658
      %s1661 = sshll.u32 [#allocation5], 4
      %s1662 = int_to_ptr.vmem [resolvable:$true] %s1661
      %1664 = dma.vmem_to_hbm [thread:$0]  %s1662, 32, %s5, [#allocation4]
    $region29: #{tpu_custom_call.1} parent=1 // pred_fallthru
      _
    // Predicated region
    $region30: #{tpu_custom_call.1} parent=1 // pred_check
      _
    $region31: #{tpu_custom_call.1} parent=1 // pred_check_branch
      %1666 = sbr.rel (0) target = $region33
    $region32: #{tpu_custom_call.1} parent=1 // pred_region
      %1667 = dma.done [#allocation4], 32
    $region33: #{tpu_custom_call.1} parent=1 // pred_fallthru
      _
    %1668 = vsyncpa [#allocation3], 1
    %1669 = vsyncpa [#allocation4], 1

</llo_original>
